<compile_context>
chip_gen: v5e
topology: v5e:2x2
jax: 0.10.0
libtpu: 0.0.40
codegen_flags: <defaults>
</compile_context>

<pallas_src>
import functools

import jax
import jax.numpy as jnp
from jax import lax
from jax.experimental import pallas as pl
from jax.experimental.pallas import tpu as pltpu

LN_EPS = 1e-5


# ---------------------------------------------------------------------------
# Kernels
# ---------------------------------------------------------------------------
def _ln_affine_f32(attn_ref, gamma_ref, beta_ref):
    """LayerNorm over the last dim in f32 (matches torch default), + affine."""
    x = attn_ref[...].astype(jnp.float32)                      # (tm, D)
    mean = jnp.mean(x, axis=-1, keepdims=True)
    xc = x - mean
    var = jnp.mean(xc * xc, axis=-1, keepdims=True)             # two-pass: no
    inv = lax.rsqrt(var + LN_EPS)                                # cancellation
    # gamma/beta already f32 (and carry the dropout scale in train mode).
    return xc * inv * gamma_ref[...] + beta_ref[...]


def _eval_kernel(emb_ref, attn_ref, gamma_ref, beta_ref, out_ref):
    y = _ln_affine_f32(attn_ref, gamma_ref, beta_ref)
    out_ref[...] = (emb_ref[...].astype(jnp.float32) + y).astype(out_ref.dtype)


def _train_kernel(seed_ref, emb_ref, attn_ref, gamma_ref, beta_ref, out_ref,
                  *, p):
    # gamma/beta already include the 1/(1-p) inverted-dropout scale, so the
    # kernel does a single select + add per element (no extra multiply).
    y = _ln_affine_f32(attn_ref, gamma_ref, beta_ref)

    # Per-tile seed, hashed with a large odd constant so adjacent tiles don't
    # feed consecutive integers (correlated masks) into the hardware PRNG.
    pltpu.prng_seed(seed_ref[0] ^ (pl.program_id(0) * jnp.int32(-1640531535)))
    bits = pltpu.bitcast(pltpu.prng_random_bits(y.shape), jnp.uint32)
    # Keep w.p. (1-p): integer threshold compare on the raw bits.
    threshold = jnp.uint32(min(int(p * 4294967296.0), 4294967295))
    keep = bits >= threshold

    emb32 = emb_ref[...].astype(jnp.float32)
    # dropout(LN) = keep ? LN/(1-p) : 0 ; residual folded into the select.
    out_ref[...] = jnp.where(keep, emb32 + y, emb32).astype(out_ref.dtype)


# ---------------------------------------------------------------------------
# Tiling / VMEM budgeting
# ---------------------------------------------------------------------------
def _vmem_budgets():
    """(data_budget_bytes, vmem_limit_bytes), gated on chip generation."""
    cap = None
    try:
        cap = getattr(pltpu.get_tpu_info(), "vmem_capacity_bytes", None)
    except Exception:
        cap = None
    if cap is None:
        cap = 64 * 1024 * 1024          # assume the smallest (v7x per-TC)
    if cap >= 96 * 1024 * 1024:
        # v5e / v6e: 128 MiB physical VMEM -> take big tiles.
        return 44 * 1024 * 1024, 64 * 1024 * 1024
    # v7x: 64 MiB per TensorCore; both TCs allocate their own double-buffered
    # blocks (row axis is "parallel"), so stay conservative.
    return 22 * 1024 * 1024, 40 * 1024 * 1024


def _choose_tm(rows, d, emb_itemsize, attn_itemsize, out_itemsize, budget):
    """Pick a row tile that fills (but does not bust) the VMEM data budget.

    Steady-state footprint per row of tile: 2 inputs + 1 output, each
    double-buffered by the Pallas pipeline, plus ~4 row-wide f32 temporaries
    inside the kernel body.
    """
    per_row = d * (2 * emb_itemsize + 2 * attn_itemsize + 2 * out_itemsize
                   + 4 * 4)
    tm = int(budget // max(per_row, 1))
    # Sublane multiple: 8 for 32-bit dtypes, 16 for 16-bit, 32 for 8-bit.
    mult = max(32 // emb_itemsize, 32 // attn_itemsize, 32 // out_itemsize, 8)
    tm = max(mult, min(tm, 4096))
    tm = (tm // mult) * mult
    # Don't over-allocate for tiny inputs: clamp to rows rounded up to mult.
    rows_up = ((rows + mult - 1) // mult) * mult
    return max(mult, min(tm, rows_up))


# ---------------------------------------------------------------------------
# Wrapper
# ---------------------------------------------------------------------------
def post_processing(emb, attn, gamma, beta, *, p=0.1, training=False, seed=0,
                    tm=None, donate_emb=False):
    """emb, attn: (B, S, D); gamma, beta: (D,). Returns (B, S, D)."""
    B, S, D = emb.shape
    rows = B * S

    if training and p >= 1.0:
        # Everything is dropped -> out = emb + 0.
        return emb

    data_budget, vmem_limit = _vmem_budgets()
    if tm is None:
        tm = _choose_tm(rows, D,
                        jnp.dtype(emb.dtype).itemsize,
                        jnp.dtype(attn.dtype).itemsize,
                        jnp.dtype(emb.dtype).itemsize,
                        data_budget)

    # No padding: grid = cdiv(rows, tm); the final partial block's OOB rows
    # compute garbage that Pallas discards on write (rows are independent).
    emb2 = emb.reshape(rows, D)
    attn2 = attn.reshape(rows, D)
    gamma2 = gamma.reshape(1, D).astype(jnp.float32)
    beta2 = beta.reshape(1, D).astype(jnp.float32)

    grid = (pl.cdiv(rows, tm),)
    out_shape = jax.ShapeDtypeStruct((rows, D), emb.dtype)
    compiler_params = pltpu.CompilerParams(
        # Tiles are independent (per-tile hashed PRNG seed) -> parallel is
        # safe and lets v7x shard the row axis across both TensorCores.
        dimension_semantics=("parallel",),
        vmem_limit_bytes=vmem_limit,
    )

    if training and p > 0.0:
        # Fold the 1/(1-p) inverted-dropout scale into the LN affine params so
        # the kernel's training branch is one select + one add per element.
        scale = 1.0 / (1.0 - float(p))
        gamma2 = gamma2 * scale
        beta2 = beta2 * scale
        seed_arr = jnp.asarray([seed], dtype=jnp.int32)
        kernel = functools.partial(_train_kernel, p=float(p))
        out2 = pl.pallas_call(
            kernel,
            out_shape=out_shape,
            grid_spec=pltpu.PrefetchScalarGridSpec(
                num_scalar_prefetch=1,                       # seed in SMEM
                grid=grid,
                in_specs=[
                    pl.BlockSpec((tm, D), lambda i, seed: (i, 0)),   # emb
                    pl.BlockSpec((tm, D), lambda i, seed: (i, 0)),   # attn
                    pl.BlockSpec((1, D), lambda i, seed: (0, 0)),    # gamma
                    pl.BlockSpec((1, D), lambda i, seed: (0, 0)),    # beta
                ],
                out_specs=pl.BlockSpec((tm, D), lambda i, seed: (i, 0)),
            ),
            compiler_params=compiler_params,
            input_output_aliases=({1: 0} if donate_emb else {}),
        )(seed_arr, emb2, attn2, gamma2, beta2)
    else:
        # Inference path: no scalar prefetch, no PRNG.
        out2 = pl.pallas_call(
            _eval_kernel,
            out_shape=out_shape,
            grid_spec=pl.GridSpec(
                grid=grid,
                in_specs=[
                    pl.BlockSpec((tm, D), lambda i: (i, 0)),   # emb
                    pl.BlockSpec((tm, D), lambda i: (i, 0)),   # attn
                    pl.BlockSpec((1, D), lambda i: (0, 0)),    # gamma (resident)
                    pl.BlockSpec((1, D), lambda i: (0, 0)),    # beta  (resident)
                ],
                out_specs=pl.BlockSpec((tm, D), lambda i: (i, 0)),
            ),
            compiler_params=compiler_params,
            input_output_aliases=({0: 0} if donate_emb else {}),
        )(emb2, attn2, gamma2, beta2)

    return out2.reshape(B, S, D)


# ---------------------------------------------------------------------------
# Demo / self-test
# ---------------------------------------------------------------------------
if __name__ == "__main__":
    B, S, D = 2, 8, 32
    key = jax.random.PRNGKey(0)
    k_emb, k_attn, k_g, k_b = jax.random.split(key, 4)

    emb = jax.random.normal(k_emb, (B, S, D), dtype=jnp.float32)
    attn = jax.random.normal(k_attn, (B, S, D), dtype=jnp.float32)
    # Deterministic (non-trivial) LayerNorm affine params.
    gamma = 1.0 + 0.1 * jax.random.normal(k_g, (D,), dtype=jnp.float32)
    beta = 0.1 * jax.random.normal(k_b, (D,), dtype=jnp.float32)

    def ref_eval(emb_, attn_, gamma_, beta_):
        mean = jnp.mean(attn_, axis=-1, keepdims=True)
        var = jnp.mean((attn_ - mean) ** 2, axis=-1, keepdims=True)
        return emb_ + ((attn_ - mean) * lax.rsqrt(var + LN_EPS) * gamma_ + beta_)

    # Eval-mode forward (dropout = identity), matching module.eval().
    out = jax.block_until_ready(
        post_processing(emb, attn, gamma, beta, p=0.1, training=False))
    assert jnp.allclose(out, ref_eval(emb, attn, gamma, beta),
                        atol=1e-5, rtol=1e-5), "eval mismatch vs reference"

    # Partial last block path (rows=26 not a multiple of tm=8): no wrapper pad,
    # OOB rows of the final block are discarded on write.
    B2, S2 = 2, 13
    k1, k2 = jax.random.split(key)
    emb_r = jax.random.normal(k1, (B2, S2, D), dtype=jnp.float32)
    attn_r = jax.random.normal(k2, (B2, S2, D), dtype=jnp.float32)
    out_r = jax.block_until_ready(
        post_processing(emb_r, attn_r, gamma, beta, p=0.1, training=False,
                        tm=8))
    assert jnp.allclose(out_r, ref_eval(emb_r, attn_r, gamma, beta),
                        atol=1e-5, rtol=1e-5), "partial-block mismatch"

    # Train-mode dropout uses the TPU hardware PRNG (pltpu.prng_*), which only
    # lowers on real TPU hardware — exercise it only when actually on TPU.
    if jax.default_backend() == "tpu":
        out_train = jax.block_until_ready(
            post_processing(emb, attn, gamma, beta, p=0.1, training=True,
                            seed=1234))
        assert out_train.shape == (B, S, D)
        assert bool(jnp.all(jnp.isfinite(out_train)))

    print("KERNEL_OK")
</pallas_src>

<mosaic_0001>
module attributes {stable_mosaic.version = 11 : i64} {
  func.func @_eval_kernel(%arg0: i32, %arg1: memref<16x32xf32, #tpu.memory_space<vmem>>, %arg2: memref<16x32xf32, #tpu.memory_space<vmem>>, %arg3: memref<1x32xf32, #tpu.memory_space<vmem>>, %arg4: memref<1x32xf32, #tpu.memory_space<vmem>>, %arg5: memref<16x32xf32, #tpu.memory_space<vmem>>) attributes {dimension_semantics = [#tpu.dimension_semantics<parallel>], iteration_bounds = array<i64: 1>, scalar_prefetch = 0 : i64, scratch_operands = 0 : i64, tpu.core_type = #tpu.core_type<tc>, window_params = [{transform_indices = @transform_0, window_bounds = array<i64: 16, 32>}, {transform_indices = @transform_1, window_bounds = array<i64: 16, 32>}, {pipeline_mode = #tpu.pipeline_mode<synchronous>, transform_indices = @transform_2, window_bounds = array<i64: 1, 32>}, {pipeline_mode = #tpu.pipeline_mode<synchronous>, transform_indices = @transform_3, window_bounds = array<i64: 1, 32>}, {transform_indices = @transform_4, window_bounds = array<i64: 16, 32>}]} {
    %c0 = arith.constant 0 : index
    %c0_0 = arith.constant 0 : index
    %0 = vector.load %arg2[%c0, %c0_0] : memref<16x32xf32, #tpu.memory_space<vmem>>, vector<16x32xf32>
    %cst = arith.constant dense<0.000000e+00> : vector<16xf32>
    %1 = vector.multi_reduction <add>, %0, %cst [1] : vector<16x32xf32> to vector<16xf32>
    %2 = vector.shape_cast %1 : vector<16xf32> to vector<16x1xf32>
    %cst_1 = arith.constant 3.200000e+01 : f32
    %3 = vector.broadcast %cst_1 : f32 to vector<16x1xf32>
    %4 = arith.divf %2, %3 : vector<16x1xf32>
    %5 = vector.broadcast %4 : vector<16x1xf32> to vector<16x32xf32>
    %6 = arith.subf %0, %5 : vector<16x32xf32>
    %7 = arith.mulf %6, %6 : vector<16x32xf32>
    %cst_2 = arith.constant dense<0.000000e+00> : vector<16xf32>
    %8 = vector.multi_reduction <add>, %7, %cst_2 [1] : vector<16x32xf32> to vector<16xf32>
    %9 = vector.shape_cast %8 : vector<16xf32> to vector<16x1xf32>
    %cst_3 = arith.constant 3.200000e+01 : f32
    %10 = vector.broadcast %cst_3 : f32 to vector<16x1xf32>
    %11 = arith.divf %9, %10 : vector<16x1xf32>
    %cst_4 = arith.constant 9.99999974E-6 : f32
    %12 = vector.broadcast %cst_4 : f32 to vector<16x1xf32>
    %13 = arith.addf %11, %12 : vector<16x1xf32>
    %14 = math.rsqrt %13 : vector<16x1xf32>
    %15 = vector.broadcast %14 : vector<16x1xf32> to vector<16x32xf32>
    %16 = arith.mulf %6, %15 : vector<16x32xf32>
    %c0_5 = arith.constant 0 : index
    %c0_6 = arith.constant 0 : index
    %17 = vector.load %arg3[%c0_5, %c0_6] : memref<1x32xf32, #tpu.memory_space<vmem>>, vector<1x32xf32>
    %18 = vector.broadcast %17 : vector<1x32xf32> to vector<16x32xf32>
    %19 = arith.mulf %16, %18 : vector<16x32xf32>
    %c0_7 = arith.constant 0 : index
    %c0_8 = arith.constant 0 : index
    %20 = vector.load %arg4[%c0_7, %c0_8] : memref<1x32xf32, #tpu.memory_space<vmem>>, vector<1x32xf32>
    %21 = vector.broadcast %20 : vector<1x32xf32> to vector<16x32xf32>
    %22 = arith.addf %19, %21 : vector<16x32xf32>
    %c0_9 = arith.constant 0 : index
    %c0_10 = arith.constant 0 : index
    %23 = vector.load %arg1[%c0_9, %c0_10] : memref<16x32xf32, #tpu.memory_space<vmem>>, vector<16x32xf32>
    %24 = arith.addf %23, %22 : vector<16x32xf32>
    %c0_11 = arith.constant 0 : index
    %c0_12 = arith.constant 0 : index
    %25 = vector.load %arg5[%c0_11, %c0_12] : memref<16x32xf32, #tpu.memory_space<vmem>>, vector<16x32xf32>
    tpu.vector_store %arg5[%c0_11, %c0_12], %24 {strides = array<i32>} : memref<16x32xf32, #tpu.memory_space<vmem>>, vector<16x32xf32>,
    return
  }
  func.func @transform_0(%arg0: i32) -> (i32, i32) {
    %c0_i32 = arith.constant 0 : i32
    %c0_i32_0 = arith.constant 0 : i32
    return %arg0, %c0_i32 : i32, i32
  }
  func.func @transform_1(%arg0: i32) -> (i32, i32) {
    %c0_i32 = arith.constant 0 : i32
    %c0_i32_0 = arith.constant 0 : i32
    return %arg0, %c0_i32 : i32, i32
  }
  func.func @transform_2(%arg0: i32) -> (i32, i32) {
    %c0_i32 = arith.constant 0 : i32
    %c0_i32_0 = arith.constant 0 : i32
    %c0_i32_1 = arith.constant 0 : i32
    return %c0_i32, %c0_i32_0 : i32, i32
  }
  func.func @transform_3(%arg0: i32) -> (i32, i32) {
    %c0_i32 = arith.constant 0 : i32
    %c0_i32_0 = arith.constant 0 : i32
    %c0_i32_1 = arith.constant 0 : i32
    return %c0_i32, %c0_i32_0 : i32, i32
  }
  func.func @transform_4(%arg0: i32) -> (i32, i32) {
    %c0_i32 = arith.constant 0 : i32
    %c0_i32_0 = arith.constant 0 : i32
    return %arg0, %c0_i32 : i32, i32
  }
}

</mosaic_0001>

<llo_original>
// kernel: tpu_custom_call.1
$region0: #{tpu_custom_call.1}
  #allocation0 [shape = 'u32[]', space=smem, size = 0x4, offset = 0x4, fixed_abs, tag = 'smem constant byte address 0x4 - core index']
  #allocation1 [shape = 'u32[72,128]{1,0:T(1,128)}', space=vmem, size = 0x9000, scoped, tag = 'internal scratch']
  %s0 = inlined_call_operand.hbm [shape: f32[16,32], index: 0, kind: input, shape index: {}]
  %s1 = inlined_call_operand.hbm [shape: f32[16,32], index: 1, kind: input, shape index: {}]
  %s2 = inlined_call_operand.vmem [shape: f32[1,32], index: 2, kind: input, shape index: {}]
  %s3 = inlined_call_operand.vmem [shape: f32[1,32], index: 3, kind: input, shape index: {}]
  %s4 = inlined_call_operand.hbm [shape: f32[16,32], index: 4, kind: output, shape index: {}]
  %s5 = sld [smem:[#allocation0]]
  $region34: #{tpu_custom_call.1} parent=0
    _
  %s7 = ssub.s32 1, %s5
  %s8 = scalar_select 0, %s7, %s5
  $region1: #{tpu_custom_call.1} parent=0
    #allocation2 [shape = 'u8[8192]{0}', space=vmem, size = 0x2000, scoped, tag = 'input window, operand 0, single buffered']
    #allocation3 [shape = 's32[1]{0}', space=sflag, size = 0x4, scoped, tag = 'scoped memory for tpu_custom_call.1']
    #allocation4 [shape = 's32[1]{0}', space=sflag, size = 0x4, scoped, tag = 'scoped memory for tpu_custom_call.1']
    #allocation5 [shape = 'u8[8192]{0}', space=vmem, size = 0x2000, scoped, tag = 'input window, operand 1, single buffered']
    #allocation6 [shape = 's32[1]{0}', space=sflag, size = 0x4, scoped, tag = 'scoped memory for tpu_custom_call.1']
    #allocation7 [shape = 'u8[8192]{0}', space=vmem, size = 0x2000, scoped, tag = 'output window, operand 0, single buffered']
    %9 = vsyncpa [#allocation3], 0
    %10 = vsyncpa [#allocation6], 0
    %11 = vsyncpa [#allocation4], 0
    // Predicated region
    $region2: #{tpu_custom_call.1} parent=1 // pred_check
      _
    $region3: #{tpu_custom_call.1} parent=1 // pred_check_branch
      %13 = sbr.rel (0) target = $region5
    $region4: #{tpu_custom_call.1} parent=1 // pred_region
      %15 = vsyncadd [#allocation3], 0
      %s16 = sshll.u32 %s0, 4
      %s17 = int_to_ptr.hbm [resolvable:$true] %s16
      %s18 = sshll.u32 [#allocation2], 4
      %s19 = int_to_ptr.vmem [resolvable:$true] %s18
      %24 = dma.hbm_to_vmem [thread:$0]  %s17, 256, %s19, [#allocation3], 128, 128, 8
    $region5: #{tpu_custom_call.1} parent=1 // pred_fallthru
      _
    // Predicated region
    $region6: #{tpu_custom_call.1} parent=1 // pred_check
      _
    $region7: #{tpu_custom_call.1} parent=1 // pred_check_branch
      %26 = sbr.rel (0) target = $region9
    $region8: #{tpu_custom_call.1} parent=1 // pred_region
      %28 = vsyncadd [#allocation6], 0
      %s29 = sshll.u32 %s1, 4
      %s30 = int_to_ptr.hbm [resolvable:$true] %s29
      %s31 = sshll.u32 [#allocation5], 4
      %s32 = int_to_ptr.vmem [resolvable:$true] %s31
      %37 = dma.hbm_to_vmem [thread:$0]  %s30, 256, %s32, [#allocation6], 128, 128, 8
    $region9: #{tpu_custom_call.1} parent=1 // pred_fallthru
      _
    // Predicated region
    $region10: #{tpu_custom_call.1} parent=1 // pred_check
      _
    $region11: #{tpu_custom_call.1} parent=1 // pred_check_branch
      %39 = sbr.rel (0) target = $region13
    $region12: #{tpu_custom_call.1} parent=1 // pred_region
      _
    $region13: #{tpu_custom_call.1} parent=1 // pred_fallthru
      _
    // Predicated region
    $region14: #{tpu_custom_call.1} parent=1 // pred_check
      _
    $region15: #{tpu_custom_call.1} parent=1 // pred_check_branch
      %41 = sbr.rel (0) target = $region17
    $region16: #{tpu_custom_call.1} parent=1 // pred_region
      _
    $region17: #{tpu_custom_call.1} parent=1 // pred_fallthru
      _
    // Predicated region
    $region18: #{tpu_custom_call.1} parent=1 // pred_check
      _
    $region19: #{tpu_custom_call.1} parent=1 // pred_check_branch
      %43 = sbr.rel (0) target = $region21
    $region20: #{tpu_custom_call.1} parent=1 // pred_region
      %45 = dma.done [#allocation3], 256
    $region21: #{tpu_custom_call.1} parent=1 // pred_fallthru
      _
    // Predicated region
    $region22: #{tpu_custom_call.1} parent=1 // pred_check
      _
    $region23: #{tpu_custom_call.1} parent=1 // pred_check_branch
      %47 = sbr.rel (0) target = $region25
    $region24: #{tpu_custom_call.1} parent=1 // pred_region
      %49 = dma.done [#allocation6], 256
    $region25: #{tpu_custom_call.1} parent=1 // pred_fallthru
      _
    %v50 = vld [vmem:[#allocation5] sm:$0xff]
    %v51 = vld [vmem:[#allocation5 + $0x8] sm:$0xff]
    %vm52 = vcmask 261120
    %v53 = vsel %vm52, %v50, 0.0
    %54 = vadd.xlane.f32.xlu0 %v53
    %v55 = vpop.xlane.xlu0 %54
    %v56 = vsel %vm52, %v51, 0.0
    %57 = vadd.xlane.f32.xlu0 %v56
    %v58 = vpop.xlane.xlu0 %57
    %v59 = vrcp.pop 32.0
    %v60 = vmul.f32 32.0, %v59
    %v61 = vsub.f32 1.0, %v60
    %v62 = vmul.f32 %v59, %v61
    %v63 = vadd.f32 %v59, %v62
    %vm64 = vweird.f32 %v59
    %v65 = vsel %vm64, %v59, %v63
    %v66 = vmul.f32 %v55, %v65
    %v67 = vmul.f32 %v58, %v65
    %v68 = vsub.f32 %v50, %v66
    %v69 = vsub.f32 %v51, %v67
    %v70 = vmul.f32 %v68, %v68
    %v71 = vmul.f32 %v69, %v69
    %v72 = vsel %vm52, %v70, 0.0
    %73 = vadd.xlane.f32.xlu0 %v72
    %v74 = vpop.xlane.xlu0 %73
    %v75 = vsel %vm52, %v71, 0.0
    %76 = vadd.xlane.f32.xlu0 %v75
    %v77 = vpop.xlane.xlu0 %76
    %v78 = vmul.f32 %v74, %v65
    %v79 = vmul.f32 %v77, %v65
    %v80 = vadd.f32 %v78, 1e-05
    %v81 = vadd.f32 %v79, 1e-05
    %v82 = vrsqrt.pop %v80
    %v83 = vmul.f32 %v82, %v80
    %v84 = vmul.f32 %v83, %v82
    %v85 = vmul.f32 0.5, %v84
    %v86 = vsub.f32 1.5, %v85
    %v87 = vmul.f32 %v82, %v86
    %vm88 = vweird.f32 %v80
    %vm89 = vweird.f32 %v82
    %vm90 = vmor %vm88, %vm89
    %v91 = vsel %vm90, %v82, %v87
    %v92 = vrsqrt.pop %v81
    %v93 = vmul.f32 %v92, %v81
    %v94 = vmul.f32 %v93, %v92
    %v95 = vmul.f32 0.5, %v94
    %v96 = vsub.f32 1.5, %v95
    %v97 = vmul.f32 %v92, %v96
    %vm98 = vweird.f32 %v81
    %vm99 = vweird.f32 %v92
    %vm100 = vmor %vm98, %vm99
    %v101 = vsel %vm100, %v92, %v97
    %v102 = vmul.f32 %v68, %v91
    %v103 = vmul.f32 %v69, %v101
    %v104 = vld [vmem:[%s2] sm:$0x1]
    %v106 = vperm.slane %v104, 0
    %v108 = vmul.f32 %v102, %v106
    %v109 = vmul.f32 %v103, %v106
    %v110 = vld [vmem:[%s3] sm:$0x1]
    %v112 = vperm.slane %v110, 0
    %v114 = vadd.f32 %v108, %v112
    %v115 = vadd.f32 %v109, %v112
    %v116 = vld [vmem:[#allocation2] sm:$0xff]
    %v117 = vld [vmem:[#allocation2 + $0x8] sm:$0xff]
    %v118 = vadd.f32 %v116, %v114
    %v119 = vadd.f32 %v117, %v115
    %120 = vst.msk [vmem:[#allocation7] sm:$0xff] %vm52, %v118
    %121 = vst.msk [vmem:[#allocation7 + $0x8] sm:$0xff] %vm52, %v119
    // Predicated region
    $region26: #{tpu_custom_call.1} parent=1 // pred_check
      _
    $region27: #{tpu_custom_call.1} parent=1 // pred_check_branch
      %123 = sbr.rel (0) target = $region29
    $region28: #{tpu_custom_call.1} parent=1 // pred_region
      %125 = vsyncadd [#allocation4], 0
      %s126 = sshll.u32 [#allocation7], 4
      %s127 = int_to_ptr.vmem [resolvable:$true] %s126
      %s128 = sshll.u32 %s4, 4
      %s129 = int_to_ptr.hbm [resolvable:$true] %s128
      %134 = dma.vmem_to_hbm [thread:$0]  %s127, 256, %s129, [#allocation4], 128, 128, 8
    $region29: #{tpu_custom_call.1} parent=1 // pred_fallthru
      _
    // Predicated region
    $region30: #{tpu_custom_call.1} parent=1 // pred_check
      _
    $region31: #{tpu_custom_call.1} parent=1 // pred_check_branch
      %136 = sbr.rel (0) target = $region33
    $region32: #{tpu_custom_call.1} parent=1 // pred_region
      %138 = dma.done [#allocation4], 256
    $region33: #{tpu_custom_call.1} parent=1 // pred_fallthru
      _
    %139 = vsyncpa [#allocation3], 1
    %140 = vsyncpa [#allocation6], 1
    %141 = vsyncpa [#allocation4], 1

</llo_original>
